<compile_context>
chip_gen: v7x
topology: tpu7x:2x2x1
jax: 0.10.0
libtpu: 0.0.40
codegen_flags: <defaults>
</compile_context>

<pallas_src>
import functools

import jax
import jax.numpy as jnp
from jax.experimental import pallas as pl
from jax.experimental.pallas import tpu as pltpu


def _mlp2d_kernel(x_ref, w1_ref, w2_ref, o_ref, *, c_mid_chunk):
    # x_ref : (C_in, t)     f32 tile straight from HBM (cast to bf16 here, on the VPU)
    # w1_ref: (C_mid, C_in) bf16, PyTorch (out, in) layout
    # w2_ref: (C_out, C_mid) bf16
    # o_ref : (C_out, t)
    x = x_ref[...].astype(jnp.bfloat16)                 # cast hidden under the MXU
    c_mid = w1_ref.shape[0]
    n_chunks = -(-c_mid // c_mid_chunk)

    if n_chunks == 1:
        h = jnp.dot(w1_ref[...], x, preferred_element_type=jnp.float32)   # (C_mid, t)
        h = jnp.clip(h, 0.0, 6.0).astype(jnp.bfloat16)                    # relu6
        y = jnp.dot(w2_ref[...], h, preferred_element_type=jnp.float32)   # (C_out, t)
    else:
        # Large-C_mid path: bound the live (chunk, t) f32 intermediate.
        c_out, t = o_ref.shape
        y = jnp.zeros((c_out, t), jnp.float32)
        for c0 in range(0, c_mid, c_mid_chunk):          # static Python loop
            c1 = min(c0 + c_mid_chunk, c_mid)
            h = jnp.dot(w1_ref[c0:c1, :], x, preferred_element_type=jnp.float32)
            h = jnp.clip(h, 0.0, 6.0).astype(jnp.bfloat16)
            y = y + jnp.dot(w2_ref[:, c0:c1], h, preferred_element_type=jnp.float32)

    o_ref[...] = y.astype(o_ref.dtype)


def _physical_vmem_bytes():
    """Per-TensorCore VMEM capacity; conservative (v7x) fallback if unknown."""
    try:
        info = pltpu.get_tpu_info()
        cap = int(getattr(info, "vmem_capacity_bytes", 0) or 0)
        if cap > 0:
            return cap
    except Exception:
        pass
    return 64 * 1024 * 1024


def mlp2d_forward(x_nchw, w1, w2, *, t_hw=None, c_mid_chunk=1024, out_dtype=None):
    """x_nchw: (N, C_in, H, W); w1: (C_mid, C_in); w2: (C_out, C_mid).

    Weights are in PyTorch Conv2d (out, in) layout (kernel_size=1 squeezed).
    out_dtype=jnp.bfloat16 halves writeback traffic on v5e if the consumer allows it.
    """
    N, C_in, H, W = x_nchw.shape
    C_mid, C_in_w = w1.shape
    C_out, C_mid_w = w2.shape
    assert C_in_w == C_in and C_mid_w == C_mid
    HW = H * W
    out_dtype = jnp.dtype(out_dtype or x_nchw.dtype)

    # NCHW -> (N, C, H*W): pure reshape. Channels on sublanes, spatial on lanes ->
    # lane-dense (multiple-of-128) output stores.
    x3 = x_nchw.reshape(N, C_in, HW)

    # Weights are tiny: cast once in the wrapper. x is cast inside the kernel.
    w1b = w1.astype(jnp.bfloat16)
    w2b = w2.astype(jnp.bfloat16)

    # ---- generation-aware VMEM budget & spatial tile ------------------------
    vmem_phys = _physical_vmem_bytes()
    # ~48 MiB on v7x (64 MiB physical), ~96 MiB on v5e/v6e (128 MiB physical).
    vmem_limit = int(min(vmem_phys * 3 // 4, 112 * 1024 * 1024))

    if t_hw is None:
        t_hw = 1024 if vmem_phys > 96 * 1024 * 1024 else 512

    c_chunk = max(1, min(c_mid_chunk, C_mid))
    x_bufs = 3 if C_in < 128 else 2   # small-K regime is DMA-latency bound

    def fits(t):
        x_bytes = C_in * t * x3.dtype.itemsize * x_bufs             # pipelined x tiles
        o_bytes = C_out * t * out_dtype.itemsize * 2                # double-buffered out
        w_bytes = (C_mid * C_in + C_out * C_mid) * 2                # bf16, single-buffered
        tmp = c_chunk * t * (4 + 2) + C_out * t * 4                 # f32 h + bf16 h + f32 acc
        return x_bytes + o_bytes + w_bytes + tmp <= int(vmem_limit * 0.6)

    t = max(128, min(t_hw, -(-HW // 128) * 128))
    t = (t // 128) * 128
    while t > 128 and not fits(t):
        t -= 128

    grid = (N, -(-HW // t))  # ragged last block handled by Pallas (masked stores)

    flops = 2 * N * HW * (C_in * C_mid + C_mid * C_out)
    bytes_accessed = (
        x3.size * x3.dtype.itemsize
        + (C_mid * C_in + C_out * C_mid) * 2
        + N * C_out * HW * out_dtype.itemsize
    )

    kernel = functools.partial(_mlp2d_kernel, c_mid_chunk=c_chunk)

    def build(with_pipeline_modes):
        # None in block_shape squeezes the size-1 batch dim (== pl.Squeezed()).
        if with_pipeline_modes:
            x_kw = dict(pipeline_mode=pl.Buffered(x_bufs))
            w_kw = dict(pipeline_mode=pl.Buffered(1))    # invariant weights: single buffer
        else:
            x_kw = {}
            w_kw = {}
        return pl.pallas_call(
            kernel,
            out_shape=jax.ShapeDtypeStruct((N, C_out, HW), out_dtype),
            grid_spec=pltpu.PrefetchScalarGridSpec(
                num_scalar_prefetch=0,
                grid=grid,
                in_specs=[
                    pl.BlockSpec((None, C_in, t), lambda n, j: (n, 0, j), **x_kw),
                    pl.BlockSpec((C_mid, C_in), lambda n, j: (0, 0), **w_kw),
                    pl.BlockSpec((C_out, C_mid), lambda n, j: (0, 0), **w_kw),
                ],
                out_specs=pl.BlockSpec((None, C_out, t), lambda n, j: (n, 0, j)),
            ),
            compiler_params=pltpu.CompilerParams(
                # Both grid axes independent -> megacore sharding where available.
                dimension_semantics=("parallel", "parallel"),
                vmem_limit_bytes=vmem_limit,
            ),
            cost_estimate=pl.CostEstimate(
                flops=flops, transcendentals=0, bytes_accessed=bytes_accessed
            ),
        )

    try:
        out3 = build(True)(x3, w1b, w2b)
        jax.block_until_ready(out3)
    except Exception:
        # Fallback without explicit pipeline_mode (default double-buffering) in case
        # pl.Buffered is unsupported on this jax build.
        out3 = build(False)(x3, w1b, w2b)

    return out3.reshape(N, C_out, H, W)


def reference_forward_f32(x_nchw, w1, w2):
    """Pure-JAX f32 reference: 1x1 conv -> relu6 -> 1x1 conv (module semantics)."""
    h = jnp.einsum("nchw,mc->nmhw", x_nchw, w1)
    h = jnp.clip(h, 0.0, 6.0)
    return jnp.einsum("nmhw,om->nohw", h, w2)


def reference_forward_bf16(x_nchw, w1, w2):
    """Reference mirroring the kernel's bf16-operand / f32-accumulate path."""
    xb = x_nchw.astype(jnp.bfloat16)
    w1b = w1.astype(jnp.bfloat16)
    w2b = w2.astype(jnp.bfloat16)
    h = jnp.einsum("nchw,mc->nmhw", xb, w1b, preferred_element_type=jnp.float32)
    h = jnp.clip(h, 0.0, 6.0).astype(jnp.bfloat16)
    y = jnp.einsum("nmhw,om->nohw", h, w2b, preferred_element_type=jnp.float32)
    return y.astype(x_nchw.dtype)


if __name__ == "__main__":
    key = jax.random.PRNGKey(0)
    kx, k1, k2, kx2 = jax.random.split(key, 4)

    # Small shapes: batch=2, in_channels=4, spatial=16x16, expand_ratio=4 -> mid=16.
    N, C_in, H, W = 2, 4, 16, 16
    expand_ratio = 4
    C_mid = round(C_in * expand_ratio)  # 16
    C_out = C_in                        # out_channels defaults to in_channels

    x = jax.random.normal(kx, (N, C_in, H, W), dtype=jnp.float32)

    # PyTorch conv weight shape is (out, in, 1, 1); the kernel consumes (out, in).
    w1_conv = jax.random.normal(k1, (C_mid, C_in, 1, 1), dtype=jnp.float32) * 0.1
    w2_conv = jax.random.normal(k2, (C_out, C_mid, 1, 1), dtype=jnp.float32) * 0.1
    w1 = w1_conv[:, :, 0, 0]  # (C_mid, C_in)
    w2 = w2_conv[:, :, 0, 0]  # (C_out, C_mid)

    y = mlp2d_forward(x, w1, w2)
    jax.block_until_ready(y)

    y_ref_bf16 = reference_forward_bf16(x, w1, w2)
    y_ref_f32 = reference_forward_f32(x, w1, w2)

    assert y.shape == (N, C_out, H, W)
    assert jnp.allclose(y, y_ref_bf16, atol=1e-2, rtol=1e-2), "mismatch vs bf16 reference"
    assert jnp.allclose(y, y_ref_f32, atol=5e-2, rtol=5e-2), "mismatch vs f32 reference"

    # Ragged spatial extent (ViT-style 14x14 = 196, not a multiple of 128):
    # exercises the pad-free boundary handling (masked partial-block stores).
    Hr = Wr = 14
    xr = jax.random.normal(kx2, (N, C_in, Hr, Wr), dtype=jnp.float32)
    yr = mlp2d_forward(xr, w1, w2)
    jax.block_until_ready(yr)
    yr_ref = reference_forward_bf16(xr, w1, w2)
    assert yr.shape == (N, C_out, Hr, Wr)
    assert jnp.allclose(yr, yr_ref, atol=1e-2, rtol=1e-2), "mismatch on ragged spatial shape"

    print("KERNEL_OK")
</pallas_src>

<mosaic_0001>
module attributes {stable_mosaic.version = 11 : i64} {
  func.func @_mlp2d_kernel(%arg0: i32, %arg1: i32, %arg2: memref<1x4x256xf32, #tpu.memory_space<vmem>>, %arg3: memref<16x4xbf16, #tpu.memory_space<vmem>>, %arg4: memref<4x16xbf16, #tpu.memory_space<vmem>>, %arg5: memref<1x4x256xf32, #tpu.memory_space<vmem>>) attributes {dimension_semantics = [#tpu.dimension_semantics<parallel>, #tpu.dimension_semantics<parallel>], iteration_bounds = array<i64: 2, 1>, scalar_prefetch = 0 : i64, scratch_operands = 0 : i64, tpu.core_type = #tpu.core_type<tc>, window_params = [{transform_indices = @transform_0, window_bounds = array<i64: 1, 4, 256>}, {pipeline_mode = #tpu.pipeline_mode<synchronous>, transform_indices = @transform_1, window_bounds = array<i64: 16, 4>}, {pipeline_mode = #tpu.pipeline_mode<synchronous>, transform_indices = @transform_2, window_bounds = array<i64: 4, 16>}, {transform_indices = @transform_3, window_bounds = array<i64: 1, 4, 256>}]} {
    %c0 = arith.constant 0 : index
    %c0_0 = arith.constant 0 : index
    %c0_1 = arith.constant 0 : index
    %0 = vector.load %arg2[%c0, %c0_0, %c0_1] : memref<1x4x256xf32, #tpu.memory_space<vmem>>, vector<1x4x256xf32>
    %1 = vector.shape_cast %0 : vector<1x4x256xf32> to vector<4x256xf32>
    %2 = arith.truncf %1 : vector<4x256xf32> to vector<4x256xbf16>
    %c0_2 = arith.constant 0 : index
    %c0_3 = arith.constant 0 : index
    %3 = vector.load %arg3[%c0_2, %c0_3] : memref<16x4xbf16, #tpu.memory_space<vmem>>, vector<16x4xbf16>
    %cst = arith.constant dense<0.000000e+00> : vector<16x256xf32>
    %4 = tpu.matmul %3, %2, %cst {dimension_numbers = #tpu.dot_dimension_numbers<[1], [0], [0], [1], [0, 0, 1, 1], [], []>} : vector<16x4xbf16>, vector<4x256xbf16>, vector<16x256xf32> -> vector<16x256xf32>
    %cst_4 = arith.constant 0.000000e+00 : f32
    %cst_5 = arith.constant 6.000000e+00 : f32
    %5 = vector.broadcast %cst_4 : f32 to vector<16x256xf32>
    %6 = arith.maximumf %5, %4 : vector<16x256xf32>
    %7 = vector.broadcast %cst_5 : f32 to vector<16x256xf32>
    %8 = arith.minimumf %7, %6 : vector<16x256xf32>
    %9 = arith.truncf %8 : vector<16x256xf32> to vector<16x256xbf16>
    %c0_6 = arith.constant 0 : index
    %c0_7 = arith.constant 0 : index
    %10 = vector.load %arg4[%c0_6, %c0_7] : memref<4x16xbf16, #tpu.memory_space<vmem>>, vector<4x16xbf16>
    %cst_8 = arith.constant dense<0.000000e+00> : vector<4x256xf32>
    %11 = tpu.matmul %10, %9, %cst_8 {dimension_numbers = #tpu.dot_dimension_numbers<[1], [0], [0], [1], [0, 0, 1, 1], [], []>} : vector<4x16xbf16>, vector<16x256xbf16>, vector<4x256xf32> -> vector<4x256xf32>
    %c0_9 = arith.constant 0 : index
    %c0_10 = arith.constant 0 : index
    %c0_11 = arith.constant 0 : index
    %12 = vector.load %arg5[%c0_9, %c0_10, %c0_11] : memref<1x4x256xf32, #tpu.memory_space<vmem>>, vector<1x4x256xf32>
    %13 = vector.shape_cast %12 : vector<1x4x256xf32> to vector<4x256xf32>
    %14 = vector.shape_cast %11 : vector<4x256xf32> to vector<1x4x256xf32>
    tpu.vector_store %arg5[%c0_9, %c0_10, %c0_11], %14 {strides = array<i32>} : memref<1x4x256xf32, #tpu.memory_space<vmem>>, vector<1x4x256xf32>,
    return
  }
  func.func @transform_0(%arg0: i32, %arg1: i32) -> (i32, i32, i32) {
    %c0_i32 = arith.constant 0 : i32
    %c0_i32_0 = arith.constant 0 : i32
    return %arg0, %c0_i32, %arg1 : i32, i32, i32
  }
  func.func @transform_1(%arg0: i32, %arg1: i32) -> (i32, i32) {
    %c0_i32 = arith.constant 0 : i32
    %c0_i32_0 = arith.constant 0 : i32
    %c0_i32_1 = arith.constant 0 : i32
    return %c0_i32, %c0_i32_0 : i32, i32
  }
  func.func @transform_2(%arg0: i32, %arg1: i32) -> (i32, i32) {
    %c0_i32 = arith.constant 0 : i32
    %c0_i32_0 = arith.constant 0 : i32
    %c0_i32_1 = arith.constant 0 : i32
    return %c0_i32, %c0_i32_0 : i32, i32
  }
  func.func @transform_3(%arg0: i32, %arg1: i32) -> (i32, i32, i32) {
    %c0_i32 = arith.constant 0 : i32
    %c0_i32_0 = arith.constant 0 : i32
    return %arg0, %c0_i32, %arg1 : i32, i32, i32
  }
}

</mosaic_0001>

<llo_original>
// kernel: tpu_custom_call.1
$region0: #{tpu_custom_call.1}
  #allocation0 [shape = 'u32[]', space=smem, size = 0x4, offset = 0x4, fixed_abs, tag = 'smem constant byte address 0x4 - core index']
  #allocation1 [shape = 'u32[144,128]{1,0:T(1,128)}', space=vmem, size = 0x12000, scoped, tag = 'internal scratch']
  %s0 = inlined_call_operand.hbm [shape: f32[2,4,256], index: 0, kind: input, shape index: {}]
  %s1 = inlined_call_operand.vmem [shape: bf16[16,4], index: 1, kind: input, shape index: {}]
  %s2 = inlined_call_operand.vmem [shape: bf16[4,16], index: 2, kind: input, shape index: {}]
  %s3 = inlined_call_operand.hbm [shape: f32[2,4,256], index: 3, kind: output, shape index: {}]
  %s4 = sld [smem:[#allocation0]]
  $region49: #{tpu_custom_call.1} parent=0
    _
  %s6 = ssub.s32 1, %s4
  %s7 = scalar_select 0, %s6, %s4
  $region1: #{tpu_custom_call.1} parent=0
    #allocation2 [shape = 'u8[8192]{0}', space=vmem, size = 0x2000, scoped, tag = 'input window, operand 0']
    #allocation3 [shape = 's32[2]{0}', space=sflag, size = 0x8, scoped, tag = 'scoped memory for tpu_custom_call.1']
    #allocation4 [shape = 's32[2]{0}', space=sflag, size = 0x8, scoped, tag = 'scoped memory for tpu_custom_call.1']
    #allocation5 [shape = 'u8[8192]{0}', space=vmem, size = 0x2000, scoped, tag = 'output window, operand 0']
    %8 = vsyncpa [#allocation3], 0
    %s9 = scalar_lea.sflag [#allocation3], 1
    %10 = vsyncpa %s9, 0
    %11 = vsyncpa [#allocation4], 0
    %s12 = scalar_lea.sflag [#allocation4], 1
    %13 = vsyncpa %s12, 0
    loop: start=0, step=1, limit=4
    $region2: #{tpu_custom_call.1} parent=1 // loop_pre_header
      _
    $region3: #{tpu_custom_call.1} parent=1 // loop_header
      %s15 = sphi 0, %s19
      %p16 = scmp.ge.s32.totalorder %s15, 4
      %s22 = sphi 0, %s34
      %s23 = sphi 0, %s30
      %s24 = sphi 0, %s22
      %s25 = sphi 0, %s23
      %s26 = sphi 0, %s24
      %s27 = sphi 0, %s25
      %s39 = sphi 0, %s41
      %s42 = sphi 0, %s39
      %s43 = sphi 0, %s42
      %s59 = sphi 0, %s43
      %s63 = sphi 0, %s63
      %s65 = sphi 0, %s63
      %s66 = sphi 0, %s65
      %s80 = sphi 0, %s66
      %s84 = sphi 0, %s84
      %s86 = sphi 0, %s84
      %s87 = sphi 0, %s86
      %s101 = sphi 0, %s87
      %s109 = sphi 0, %s111
      %s112 = sphi 0, %s109
      %s113 = sphi 0, %s112
      %s129 = sphi 0, %s113
    $region4: #{tpu_custom_call.1} parent=1 // loop_header_branch
      %18 = sbr.rel (%p16) target = $region8
    $region5: #{tpu_custom_call.1} parent=1 // loop_body
      %s20 = ssub.s32 %s15, 1
      %s21 = ssub.s32 %s15, 2
      %s28 = sadd.s32 1, %s23
      %p29 = scmp.ge.s32.totalorder %s28, 1
      %s30 = scalar_select %p29, 0, %s28
      %s31 = sadd.s32 1, %s22
      %s32 = scalar_select %p29, %s31, %s22
      %p33 = scmp.ge.s32.totalorder %s32, 2
      %s34 = scalar_select %p33, 0, %s32
      %s35 = ssub.s32 %s22, %s34
      %s36 = ssub.s32 %s23, %s30
      %s37 = sor.u32 %s35, %s36
      %p38 = scmp.eq.s32.totalorder %s37, 0
      %s40 = sadd.s32 %s39, 1
      %s41 = scalar_select %p38, %s39, %s40
      %p44 = pneg %p38
      %p45 = scmp.eq.s32.totalorder %s15, 1
      %p46 = por %p44, %p45
      %p47 = scmp.ne.s32.totalorder %s39, %s42
      %p48 = scmp.eq.s32.totalorder %s15, 0
      %p49 = por %p47, %p48
      %p50 = scmp.ne.s32.totalorder %s39, %s42
      %p51 = scmp.eq.s32.totalorder %s20, 1
      %p52 = por %p50, %p51
      %p53 = scmp.ne.s32.totalorder %s42, %s43
      %p54 = scmp.eq.s32.totalorder %s20, 0
      %p55 = por %p53, %p54
      %p56 = scmp.ne.s32.totalorder %s42, %s43
      %p57 = scmp.eq.s32.totalorder %s21, 1
      %p58 = por %p56, %p57
      %p60 = scmp.ne.s32.totalorder %s43, %s59
      %p61 = scmp.eq.s32.totalorder %s21, 0
      %p62 = por %p60, %p61
      %s64 = sadd.s32 %s63, 1
      %p67 = scmp.eq.s32.totalorder %s15, 1
      %p68 = scmp.ne.s32.totalorder %s63, %s65
      %p69 = scmp.eq.s32.totalorder %s15, 0
      %p70 = por %p68, %p69
      %p71 = scmp.ne.s32.totalorder %s63, %s65
      %p72 = scmp.eq.s32.totalorder %s20, 1
      %p73 = por %p71, %p72
      %p74 = scmp.ne.s32.totalorder %s65, %s66
      %p75 = scmp.eq.s32.totalorder %s20, 0
      %p76 = por %p74, %p75
      %p77 = scmp.ne.s32.totalorder %s65, %s66
      %p78 = scmp.eq.s32.totalorder %s21, 1
      %p79 = por %p77, %p78
      %p81 = scmp.ne.s32.totalorder %s66, %s80
      %p82 = scmp.eq.s32.totalorder %s21, 0
      %p83 = por %p81, %p82
      %s85 = sadd.s32 %s84, 1
      %p88 = scmp.eq.s32.totalorder %s15, 1
      %p89 = scmp.ne.s32.totalorder %s84, %s86
      %p90 = scmp.eq.s32.totalorder %s15, 0
      %p91 = por %p89, %p90
      %p92 = scmp.ne.s32.totalorder %s84, %s86
      %p93 = scmp.eq.s32.totalorder %s20, 1
      %p94 = por %p92, %p93
      %p95 = scmp.ne.s32.totalorder %s86, %s87
      %p96 = scmp.eq.s32.totalorder %s20, 0
      %p97 = por %p95, %p96
      %p98 = scmp.ne.s32.totalorder %s86, %s87
      %p99 = scmp.eq.s32.totalorder %s21, 1
      %p100 = por %p98, %p99
      %p102 = scmp.ne.s32.totalorder %s87, %s101
      %p103 = scmp.eq.s32.totalorder %s21, 0
      %p104 = por %p102, %p103
      %s105 = ssub.s32 %s22, %s34
      %s106 = ssub.s32 %s23, %s30
      %s107 = sor.u32 %s105, %s106
      %p108 = scmp.eq.s32.totalorder %s107, 0
      %s110 = sadd.s32 %s109, 1
      %s111 = scalar_select %p108, %s109, %s110
      %p114 = pneg %p108
      %p115 = scmp.eq.s32.totalorder %s15, 1
      %p116 = por %p114, %p115
      %p117 = scmp.ne.s32.totalorder %s109, %s112
      %p118 = scmp.eq.s32.totalorder %s15, 0
      %p119 = por %p117, %p118
      %p120 = scmp.ne.s32.totalorder %s109, %s112
      %p121 = scmp.eq.s32.totalorder %s20, 1
      %p122 = por %p120, %p121
      %p123 = scmp.ne.s32.totalorder %s112, %s113
      %p124 = scmp.eq.s32.totalorder %s20, 0
      %p125 = por %p123, %p124
      %p126 = scmp.ne.s32.totalorder %s112, %s113
      %p127 = scmp.eq.s32.totalorder %s21, 1
      %p128 = por %p126, %p127
      %p130 = scmp.ne.s32.totalorder %s113, %s129
      %p131 = scmp.eq.s32.totalorder %s21, 0
      %p132 = por %p130, %p131
      %p133 = scmp.le.s32.totalorder 1, %s15
      %p134 = scmp.lt.s32.totalorder %s15, 3
      %p135 = pnand %p133, %p134
      %p136 = pneg %p135
      // Predicated region
      $region9: #{tpu_custom_call.1} parent=5 // pred_check
        _
      $region10: #{tpu_custom_call.1} parent=5 // pred_check_branch
        %138 = sbr.rel (%p135) target = $region12
      $region11: #{tpu_custom_call.1} parent=5 // pred_region
        %s139 = ssub.s32 %s15, 1
        // Predicated region
        $region13: #{tpu_custom_call.1} parent=11 // pred_check
          %p140 = pneg %p76
        $region14: #{tpu_custom_call.1} parent=11 // pred_check_branch
          %142 = sbr.rel (%p140) target = $region16
        $region15: #{tpu_custom_call.1} parent=11 // pred_region
          _
        $region16: #{tpu_custom_call.1} parent=11 // pred_fallthru
          _
        // Predicated region
        $region17: #{tpu_custom_call.1} parent=11 // pred_check
          %p143 = pneg %p97
        $region18: #{tpu_custom_call.1} parent=11 // pred_check_branch
          %145 = sbr.rel (%p143) target = $region20
        $region19: #{tpu_custom_call.1} parent=11 // pred_region
          _
        $region20: #{tpu_custom_call.1} parent=11 // pred_fallthru
          _
      $region12: #{tpu_custom_call.1} parent=5 // pred_fallthru
        _
      %p146 = scmp.lt.s32.totalorder %s15, 2
      // Predicated region
      $region21: #{tpu_custom_call.1} parent=5 // pred_check
        %p147 = pneg %p146
      $region22: #{tpu_custom_call.1} parent=5 // pred_check_branch
        %149 = sbr.rel (%p147) target = $region24
      $region23: #{tpu_custom_call.1} parent=5 // pred_region
        // Predicated region
        $region25: #{tpu_custom_call.1} parent=23 // pred_check
          %p150 = pneg %p49
        $region26: #{tpu_custom_call.1} parent=23 // pred_check_branch
          %152 = sbr.rel (%p150) target = $region28
        $region27: #{tpu_custom_call.1} parent=23 // pred_region
          %s153 = sand.u32 %s39, 1
          %s154 = scalar_lea.sflag [#allocation3], %s153
          %s155 = sand.u32 %s39, 1
          %s156 = smul.addr %s155, 8
          %s157 = scalar_lea.vmem [#allocation2], %s156
          %s158 = smul.u32 2, %s23
          %s160 = ssub.s32 128, 128
          %161 = vsyncadd %s154, %s160
          %s162 = smul.addr %s22, 2
          %s163 = sadd.s32 %s158, %s162
          %s164 = smul.addr %s163, 64
          %s165 = scalar_lea.hbm %s0, %s164
          %s167 = sshll.u32 %s157, 4
          %s168 = int_to_ptr.vmem [resolvable:$true] %s167
          %170 = dma.hbm_to_vmem [thread:$0]  %s165, 128, %s168, %s154
        $region28: #{tpu_custom_call.1} parent=23 // pred_fallthru
          _
      $region24: #{tpu_custom_call.1} parent=5 // pred_fallthru
        _
      %p171 = scmp.le.s32.totalorder 1, %s15
      %p172 = scmp.lt.s32.totalorder %s15, 3
      %p173 = pnand %p171, %p172
      %p174 = pneg %p173
      // Predicated region
      $region29: #{tpu_custom_call.1} parent=5 // pred_check
        _
      $region30: #{tpu_custom_call.1} parent=5 // pred_check_branch
        %176 = sbr.rel (%p173) target = $region32
      $region31: #{tpu_custom_call.1} parent=5 // pred_region
        %s177 = ssub.s32 %s15, 1
        %s178 = sand.u32 %s42, 1
        %s179 = scalar_lea.sflag [#allocation3], %s178
        %s180 = sand.u32 %s42, 1
        %s181 = smul.addr %s180, 8
        %s182 = scalar_lea.vmem [#allocation2], %s181
        // Predicated region
        $region33: #{tpu_custom_call.1} parent=31 // pred_check
          %p183 = pneg %p55
        $region34: #{tpu_custom_call.1} parent=31 // pred_check_branch
          %185 = sbr.rel (%p183) target = $region36
        $region35: #{tpu_custom_call.1} parent=31 // pred_region
          %186 = dma.done %s179, 128
        $region36: #{tpu_custom_call.1} parent=31 // pred_fallthru
          _
        %s187 = sand.u32 %s42, 1
        %s188 = scalar_lea.sflag [#allocation3], %s187
        %s189 = sand.u32 %s42, 1
        %s190 = smul.addr %s189, 8
        %s191 = scalar_lea.vmem [#allocation2], %s190
        %p192 = pneg %p55
        %p193 = pneg %p52
        %p194 = pneg %p76
        %p195 = pneg %p73
        %p196 = pneg %p97
        %p197 = pneg %p94
        %p198 = pneg %p125
        %p199 = pneg %p122
        %s200 = sand.u32 %s112, 1
        %s201 = scalar_lea.sflag [#allocation4], %s200
        %s202 = sand.u32 %s112, 1
        %s203 = smul.addr %s202, 8
        %s204 = scalar_lea.vmem [#allocation5], %s203
        %s205 = smul.u32 2, %s25
        %s206 = smul.u32 2, %s25
        %v208 = vld [vmem:[%s182] sm:$0xff]
        %v210 = vcombine.high %v208, %v208
        %v212 = vpack.c.bf16 %v208, %v208
        %v213 = vpack.c.bf16 %v210, %v210
        %v214 = vld [vmem:[%s1] sm:$0xf]
        %v215 = vld [vmem:[%s1 + $0x4] sm:$0xf]
        %v218 = vunpack.c.l.b16 %v214
        %v219 = vunpack.c.l.b16 %v215
        %v220 = vpack.c.b16 %v219, %v218
        %vm221 = vcmask 31744
        %v223 = vsel %vm221, %v220, 0
        %vm225 = vcmask 1041408
        %v227 = vsel %vm225, %v212, 0
        %v230 = vsel %vm225, %v213, 0
        %232 = vmatprep.subr.bf16.mxu0 %v230
        %233 = vmatpush1.bf16.msra.mxu0 %v227
        %234 = vmatprep.subr.bf16.mxu0 0
        %235 = vmatpush1.bf16.msra.mxu0 0
        %236 = vmatprep.subr.bf16.mxu0 0
        %237 = vmatpush1.bf16.msra.mxu0 0
        %238 = vmatprep.subr.bf16.mxu0 0
        %239 = vmatpush1.bf16.msra.mxu0 0
        %240 = vmatprep.subr.bf16.mxu0 0
        %241 = vmatpush1.bf16.msra.mxu0 0
        %242 = vmatprep.subr.bf16.mxu0 0
        %243 = vmatpush1.bf16.msra.mxu0 0
        %244 = vmatprep.subr.bf16.mxu0 0
        %245 = vmatpush1.bf16.msra.mxu0 0
        %246 = vmatprep.subr.bf16.mxu0 0
        %247 = vmatpush1.bf16.msra.mxu0 0
        %248 = vmatprep.subr.bf16.mxu0 0
        %249 = vmatpush1.bf16.msra.mxu0 0
        %250 = vmatprep.subr.bf16.mxu0 0
        %251 = vmatpush1.bf16.msra.mxu0 0
        %252 = vmatprep.subr.bf16.mxu0 0
        %253 = vmatpush1.bf16.msra.mxu0 0
        %254 = vmatprep.subr.bf16.mxu0 0
        %255 = vmatpush1.bf16.msra.mxu0 0
        %256 = vmatprep.subr.bf16.mxu0 0
        %257 = vmatpush1.bf16.msra.mxu0 0
        %258 = vmatprep.subr.bf16.mxu0 0
        %259 = vmatpush1.bf16.msra.mxu0 0
        %260 = vmatprep.subr.bf16.mxu0 0
        %261 = vmatpush1.bf16.msra.mxu0 0
        %262 = vmatprep.subr.bf16.mxu0 0
        %263 = vmatpush1.bf16.msra.mxu0 0
        %264 = vmatprep.mubr.bf16.mxu0 0
        %265 = vmatmul.mubr.bf16.gmra.mrb[0].mxu0 %v223
        %v266 = vpop.f32.mrb[0].mxu0
        %v267 = vadd.f32 0.0, %v266
        %v268 = vpop.f32.mrb[0].mxu0
        %v269 = vadd.f32 0.0, %v268
        %v270 = vpop.f32.mrb[0].mxu0
        %v271 = vadd.f32 0.0, %v270
        %v272 = vpop.f32.mrb[0].mxu0
        %v273 = vadd.f32 0.0, %v272
        %274 = vdwg.mxu0
        %v275 = vmax.f32 %v267, 0.0
        %v276 = vmax.f32 %v269, 0.0
        %v277 = vmax.f32 %v271, 0.0
        %v278 = vmax.f32 %v273, 0.0
        %v279 = vmin.f32 %v275, 6.0
        %v280 = vmin.f32 %v276, 6.0
        %v281 = vmin.f32 %v277, 6.0
        %v282 = vmin.f32 %v278, 6.0
        %v283 = vpack.c.bf16 %v281, %v279
        %v284 = vpack.c.bf16 %v282, %v280
        %v285 = vld [vmem:[%s2] sm:$0x3]
        %vm286 = vcmask 130048
        %v288 = vsel %vm286, %v285, 0
        %290 = vmatprep.subr.bf16.mxu0 %v284
        %291 = vmatpush1.bf16.msra.mxu0 %v283
        %292 = vmatprep.subr.bf16.mxu0 0
        %293 = vmatpush1.bf16.msra.mxu0 0
        %294 = vmatprep.subr.bf16.mxu0 0
        %295 = vmatpush1.bf16.msra.mxu0 0
        %296 = vmatprep.subr.bf16.mxu0 0
        %297 = vmatpush1.bf16.msra.mxu0 0
        %298 = vmatprep.subr.bf16.mxu0 0
        %299 = vmatpush1.bf16.msra.mxu0 0
        %300 = vmatprep.subr.bf16.mxu0 0
        %301 = vmatpush1.bf16.msra.mxu0 0
        %302 = vmatprep.subr.bf16.mxu0 0
        %303 = vmatpush1.bf16.msra.mxu0 0
        %304 = vmatprep.subr.bf16.mxu0 0
        %305 = vmatpush1.bf16.msra.mxu0 0
        %306 = vmatprep.subr.bf16.mxu0 0
        %307 = vmatpush1.bf16.msra.mxu0 0
        %308 = vmatprep.subr.bf16.mxu0 0
        %309 = vmatpush1.bf16.msra.mxu0 0
        %310 = vmatprep.subr.bf16.mxu0 0
        %311 = vmatpush1.bf16.msra.mxu0 0
        %312 = vmatprep.subr.bf16.mxu0 0
        %313 = vmatpush1.bf16.msra.mxu0 0
        %314 = vmatprep.subr.bf16.mxu0 0
        %315 = vmatpush1.bf16.msra.mxu0 0
        %316 = vmatprep.subr.bf16.mxu0 0
        %317 = vmatpush1.bf16.msra.mxu0 0
        %318 = vmatprep.subr.bf16.mxu0 0
        %319 = vmatpush1.bf16.msra.mxu0 0
        %320 = vmatprep.subr.bf16.mxu0 0
        %321 = vmatpush1.bf16.msra.mxu0 0
        %322 = vmatprep.mubr.bf16.mxu0 0
        %323 = vmatmul.mubr.bf16.gmra.mrb[0].mxu0 %v288
        %v324 = vpop.f32.mrb[0].mxu0
        %v325 = vadd.f32 0.0, %v324
        %v326 = vpop.f32.mrb[0].mxu0
        %v327 = vadd.f32 0.0, %v326
        %v328 = vpop.f32.mrb[0].mxu0
        %v329 = vpop.f32.mrb[0].mxu0
        %330 = vdwg.mxu0
        %v333 = vcombine.low %v325, %v327
        %335 = vst [vmem:[%s204] sm:$0xff] %v333
        %s336 = sand.u32 %s112, 1
        %s337 = scalar_lea.sflag [#allocation4], %s336
        %s338 = sand.u32 %s112, 1
        %s339 = smul.addr %s338, 8
        %s340 = scalar_lea.vmem [#allocation5], %s339
        // Predicated region
        $region37: #{tpu_custom_call.1} parent=31 // pred_check
          %p341 = pneg %p122
        $region38: #{tpu_custom_call.1} parent=31 // pred_check_branch
          %343 = sbr.rel (%p341) target = $region40
        $region39: #{tpu_custom_call.1} parent=31 // pred_region
          %s344 = smul.u32 2, %s25
          %s346 = ssub.s32 128, 128
          %347 = vsyncadd %s337, %s346
          %s348 = smul.addr %s24, 2
          %s349 = sadd.s32 %s344, %s348
          %s350 = smul.addr %s349, 64
          %s351 = scalar_lea.hbm %s3, %s350
          %s353 = sshll.u32 %s340, 4
          %s354 = int_to_ptr.vmem [resolvable:$true] %s353
          %356 = dma.vmem_to_hbm [thread:$0]  %s354, 128, %s351, %s337
        $region40: #{tpu_custom_call.1} parent=31 // pred_fallthru
          _
      $region32: #{tpu_custom_call.1} parent=5 // pred_fallthru
        _
      %p357 = scmp.le.s32.totalorder 2, %s15
      // Predicated region
      $region41: #{tpu_custom_call.1} parent=5 // pred_check
        %p358 = pneg %p357
      $region42: #{tpu_custom_call.1} parent=5 // pred_check_branch
        %360 = sbr.rel (%p358) target = $region44
      $region43: #{tpu_custom_call.1} parent=5 // pred_region
        %s361 = ssub.s32 %s15, 2
        // Predicated region
        $region45: #{tpu_custom_call.1} parent=43 // pred_check
          %p362 = pneg %p128
        $region46: #{tpu_custom_call.1} parent=43 // pred_check_branch
          %364 = sbr.rel (%p362) target = $region48
        $region47: #{tpu_custom_call.1} parent=43 // pred_region
          %s365 = sand.u32 %s113, 1
          %s366 = scalar_lea.sflag [#allocation4], %s365
          %s367 = sand.u32 %s113, 1
          %s368 = smul.addr %s367, 8
          %s369 = scalar_lea.vmem [#allocation5], %s368
          %370 = dma.done %s366, 128
        $region48: #{tpu_custom_call.1} parent=43 // pred_fallthru
          _
      $region44: #{tpu_custom_call.1} parent=5 // pred_fallthru
        _
    $region6: #{tpu_custom_call.1} parent=1 // loop_footer
      %s19 = sadd.s32 1, %s15
    $region7: #{tpu_custom_call.1} parent=1 // loop_footer_branch
      %14 = sbr.rel target = $region3
    $region8: #{tpu_custom_call.1} parent=1 // loop_exit
      _
    %371 = vsyncpa [#allocation3], 1
    %s372 = scalar_lea.sflag [#allocation3], 1
    %373 = vsyncpa %s372, 1
    %374 = vsyncpa [#allocation4], 1
    %s375 = scalar_lea.sflag [#allocation4], 1
    %376 = vsyncpa %s375, 1

</llo_original>
